<compile_context>
chip_gen: v7x
topology: tpu7x:2x2x1
jax: 0.10.0
libtpu: 0.0.40
codegen_flags: <defaults>
</compile_context>

<pallas_src>
import functools

import jax
import jax.numpy as jnp
from jax.experimental import pallas as pl
from jax.experimental.pallas import tpu as pltpu


def _attention_kernel(x_ref, wqkv_ref, wout_ref, bout_ref, o_ref, hcat_ref,
                      *, heads, dim_head):
    # x_ref:    (N, D)          bf16, current batch row
    # wqkv_ref: (D, 3*inner)    bf16, fused QKV weight (scale folded into q cols), resident
    # wout_ref: (inner, Dp)     bf16, output projection (lane-padded), resident
    # bout_ref: (1, Dp)         f32,  output bias (lane-padded)
    # o_ref:    (N, Dp)         output block for this batch row
    # hcat_ref: (N, inner)      f32 VMEM scratch holding the per-head outputs side by side
    inner = heads * dim_head
    x = x_ref[...]                                                        # (N, D) bf16

    # Single fused QKV projection for all heads.
    qkv = jnp.dot(x, wqkv_ref[...],
                  preferred_element_type=jnp.float32)                     # (N, 3*inner) f32

    # Per-head attention, statically unrolled (tiny N x N score tiles).
    for h in range(heads):
        lo = h * dim_head
        q = qkv[:, lo:lo + dim_head]                                      # scale pre-folded
        k = qkv[:, inner + lo:inner + lo + dim_head]
        v = qkv[:, 2 * inner + lo:2 * inner + lo + dim_head]

        # q . k^T as a contraction over dim_head (no materialized transpose).
        dots = jnp.einsum('qd,kd->qk',
                          q.astype(jnp.bfloat16), k.astype(jnp.bfloat16),
                          preferred_element_type=jnp.float32)             # (N, N) f32

        # Numerically-stable softmax; elementwise math in f32, reciprocal on the EUP.
        dots = dots - jnp.max(dots, axis=-1, keepdims=True)
        e = jnp.exp(dots)
        attn = e * pl.reciprocal(jnp.sum(e, axis=-1, keepdims=True), approx=True)

        head_out = jnp.dot(attn.astype(jnp.bfloat16), v.astype(jnp.bfloat16),
                           preferred_element_type=jnp.float32)            # (N, dh) f32
        hcat_ref[:, lo:lo + dim_head] = head_out                          # static lane offset

    # Single output projection with full contraction depth K=inner, plus bias; one store.
    out = jnp.dot(hcat_ref[...].astype(jnp.bfloat16), wout_ref[...],
                  preferred_element_type=jnp.float32)                     # (N, Dp) f32
    o_ref[...] = (out + bout_ref[...]).astype(o_ref.dtype)


def attention_forward(x, w_qkv, w_out, b_out, *, heads, dim_head):
    """x: (B, N, D); w_qkv: (D, 3*heads*dim_head); w_out: (heads*dim_head, D); b_out: (D,)."""
    B, N, D = x.shape
    inner = heads * dim_head
    assert w_qkv.shape == (D, 3 * inner), "w_qkv must be packed in torch.chunk (q|k|v) order"
    assert w_out.shape == (inner, D)
    assert b_out.shape == (D,)
    scale = dim_head ** (-0.5)

    # Lane-dense output: pad the output feature dim up to a multiple of 128.
    Dp = ((D + 127) // 128) * 128

    # One-time (wrapper/XLA-side) weight prep: fold the softmax scale into the q columns of
    # the fused QKV weight, pad the output projection to Dp lanes, cast to bf16 for the MXU.
    col_scale = jnp.concatenate([jnp.full((inner,), scale, jnp.float32),
                                 jnp.ones((2 * inner,), jnp.float32)])
    wqkv_r = (w_qkv * col_scale[None, :]).astype(jnp.bfloat16)            # (D, 3*inner)
    wout_r = jnp.pad(w_out, ((0, 0), (0, Dp - D))).astype(jnp.bfloat16)   # (inner, Dp)
    bout_r = jnp.pad(b_out, (0, Dp - D)).reshape(1, Dp).astype(jnp.float32)

    x_bf16 = x.astype(jnp.bfloat16)   # bf16 MXU inputs, halves x DMA bytes

    kernel = functools.partial(_attention_kernel, heads=heads, dim_head=dim_head)

    out_padded = pl.pallas_call(
        kernel,
        out_shape=jax.ShapeDtypeStruct((B, N, Dp), x.dtype),
        grid_spec=pltpu.PrefetchScalarGridSpec(
            num_scalar_prefetch=0,
            grid=(B,),
            in_specs=[
                pl.BlockSpec((None, N, D), lambda b: (b, 0, 0)),     # x[b]
                pl.BlockSpec((D, 3 * inner), lambda b: (0, 0)),      # whole Wqkv, VMEM-resident
                pl.BlockSpec((inner, Dp), lambda b: (0, 0)),         # whole Wout, VMEM-resident
                pl.BlockSpec((1, Dp), lambda b: (0, 0)),             # bias
            ],
            out_specs=pl.BlockSpec((None, N, Dp), lambda b: (b, 0, 0)),
            scratch_shapes=[pltpu.VMEM((N, inner), jnp.float32)],
        ),
        compiler_params=pltpu.CompilerParams(
            dimension_semantics=("parallel",)),
    )(x_bf16, wqkv_r, wout_r, bout_r)

    return out_padded[:, :, :D]


def attention_reference(x, w_qkv, w_out, b_out, *, heads, dim_head):
    """Pure-JAX f32 reference mirroring the PyTorch forward."""
    B, N, D = x.shape
    inner = heads * dim_head
    scale = dim_head ** (-0.5)
    qkv = x @ w_qkv                                            # (B, N, 3*inner)
    q, k, v = jnp.split(qkv, 3, axis=-1)

    def to_heads(t):                                           # 'b n (h d) -> b h n d'
        return t.reshape(B, N, heads, dim_head).transpose(0, 2, 1, 3)

    q, k, v = map(to_heads, (q, k, v))
    dots = jnp.einsum('bhid,bhjd->bhij', q, k) * scale
    attn = jax.nn.softmax(dots, axis=-1)
    out = jnp.einsum('bhij,bhjd->bhid', attn, v)
    out = out.transpose(0, 2, 1, 3).reshape(B, N, inner)       # 'b h n d -> b n (h d)'
    return out @ w_out + b_out


if __name__ == "__main__":
    # Small shapes consistent with the module: dim=32, heads=4, dim_head=8, seq=8, batch=2.
    B, N, D = 2, 8, 32
    heads, dim_head = 4, 8
    inner = heads * dim_head

    key = jax.random.PRNGKey(0)
    kx, kqkv, kout, kb = jax.random.split(key, 4)

    x = jax.random.normal(kx, (B, N, D), dtype=jnp.float32)
    w_qkv = (jax.random.normal(kqkv, (D, 3 * inner), dtype=jnp.float32)
             * (1.0 / jnp.sqrt(D)))
    w_out = (jax.random.normal(kout, (inner, D), dtype=jnp.float32)
             * (1.0 / jnp.sqrt(inner)))
    b_out = jax.random.normal(kb, (D,), dtype=jnp.float32) * 0.01

    y = attention_forward(x, w_qkv, w_out, b_out, heads=heads, dim_head=dim_head)
    y = jax.block_until_ready(y)

    y_ref = attention_reference(x, w_qkv, w_out, b_out, heads=heads, dim_head=dim_head)
    assert y.shape == (B, N, D)
    # bf16 MXU inputs (f32 accumulation) -> compare against the f32 reference with a
    # bf16-appropriate tolerance.
    assert jnp.allclose(y, y_ref, atol=1e-1, rtol=1e-1), "mismatch vs reference"

    print("KERNEL_OK")
</pallas_src>

<mosaic_0001>
module attributes {stable_mosaic.version = 11 : i64} {
  func.func @_attention_kernel(%arg0: i32, %arg1: memref<1x8x32xbf16, #tpu.memory_space<vmem>>, %arg2: memref<32x96xbf16, #tpu.memory_space<vmem>>, %arg3: memref<32x128xbf16, #tpu.memory_space<vmem>>, %arg4: memref<1x128xf32, #tpu.memory_space<vmem>>, %arg5: memref<1x8x128xf32, #tpu.memory_space<vmem>>, %arg6: memref<8x32xf32, #tpu.memory_space<vmem>>) attributes {dimension_semantics = [#tpu.dimension_semantics<parallel>], iteration_bounds = array<i64: 2>, scalar_prefetch = 0 : i64, scratch_operands = 1 : i64, tpu.core_type = #tpu.core_type<tc>, window_params = [{transform_indices = @transform_0, window_bounds = array<i64: 1, 8, 32>}, {pipeline_mode = #tpu.pipeline_mode<synchronous>, transform_indices = @transform_1, window_bounds = array<i64: 32, 96>}, {pipeline_mode = #tpu.pipeline_mode<synchronous>, transform_indices = @transform_2, window_bounds = array<i64: 32, 128>}, {pipeline_mode = #tpu.pipeline_mode<synchronous>, transform_indices = @transform_3, window_bounds = array<i64: 1, 128>}, {transform_indices = @transform_4, window_bounds = array<i64: 1, 8, 128>}]} {
    %c0 = arith.constant 0 : index
    %c0_0 = arith.constant 0 : index
    %c0_1 = arith.constant 0 : index
    %0 = vector.load %arg1[%c0, %c0_0, %c0_1] : memref<1x8x32xbf16, #tpu.memory_space<vmem>>, vector<1x8x32xbf16>
    %1 = vector.shape_cast %0 : vector<1x8x32xbf16> to vector<8x32xbf16>
    %c0_2 = arith.constant 0 : index
    %c0_3 = arith.constant 0 : index
    %2 = vector.load %arg2[%c0_2, %c0_3] : memref<32x96xbf16, #tpu.memory_space<vmem>>, vector<32x96xbf16>
    %cst = arith.constant dense<0.000000e+00> : vector<8x96xf32>
    %3 = tpu.matmul %1, %2, %cst {dimension_numbers = #tpu.dot_dimension_numbers<[1], [0], [0], [1], [0, 0, 1, 1], [], []>} : vector<8x32xbf16>, vector<32x96xbf16>, vector<8x96xf32> -> vector<8x96xf32>
    %4 = vector.extract_strided_slice %3 {offsets = [0, 0], sizes = [8, 8], strides = [1, 1]} : vector<8x96xf32> to vector<8x8xf32>
    %5 = vector.extract_strided_slice %3 {offsets = [0, 32], sizes = [8, 8], strides = [1, 1]} : vector<8x96xf32> to vector<8x8xf32>
    %6 = vector.extract_strided_slice %3 {offsets = [0, 64], sizes = [8, 8], strides = [1, 1]} : vector<8x96xf32> to vector<8x8xf32>
    %7 = arith.truncf %4 : vector<8x8xf32> to vector<8x8xbf16>
    %8 = arith.truncf %5 : vector<8x8xf32> to vector<8x8xbf16>
    "tpu.trace_start"() <{level = 10 : i32, message = "qd,kd->qk"}> : () -> ()
    %cst_4 = arith.constant dense<0.000000e+00> : vector<8x8xf32>
    %9 = tpu.matmul %7, %8, %cst_4 {dimension_numbers = #tpu.dot_dimension_numbers<[1], [1], [0], [0], [0, 0, 1, 0], [], []>} : vector<8x8xbf16>, vector<8x8xbf16>, vector<8x8xf32> -> vector<8x8xf32>
    "tpu.trace_stop"() : () -> ()
    %cst_5 = arith.constant dense<0xFF800000> : vector<8xf32>
    %10 = vector.multi_reduction <maximumf>, %9, %cst_5 [1] : vector<8x8xf32> to vector<8xf32>
    %11 = vector.shape_cast %10 : vector<8xf32> to vector<8x1xf32>
    %12 = vector.broadcast %11 : vector<8x1xf32> to vector<8x8xf32>
    %13 = arith.subf %9, %12 : vector<8x8xf32>
    %14 = math.exp %13 : vector<8x8xf32>
    %cst_6 = arith.constant dense<0.000000e+00> : vector<8xf32>
    %15 = vector.multi_reduction <add>, %14, %cst_6 [1] : vector<8x8xf32> to vector<8xf32>
    %16 = vector.shape_cast %15 : vector<8xf32> to vector<8x1xf32>
    %17 = tpu.reciprocal %16 {approx = true} : vector<8x1xf32> -> vector<8x1xf32>
    %18 = vector.broadcast %17 : vector<8x1xf32> to vector<8x8xf32>
    %19 = arith.mulf %14, %18 : vector<8x8xf32>
    %20 = arith.truncf %19 : vector<8x8xf32> to vector<8x8xbf16>
    %21 = arith.truncf %6 : vector<8x8xf32> to vector<8x8xbf16>
    %cst_7 = arith.constant dense<0.000000e+00> : vector<8x8xf32>
    %22 = tpu.matmul %20, %21, %cst_7 {dimension_numbers = #tpu.dot_dimension_numbers<[1], [0], [0], [1], [0, 0, 1, 1], [], []>} : vector<8x8xbf16>, vector<8x8xbf16>, vector<8x8xf32> -> vector<8x8xf32>
    %c0_8 = arith.constant 0 : index
    %c0_9 = arith.constant 0 : index
    %23 = vector.load %arg6[%c0_8, %c0_9] : memref<8x32xf32, #tpu.memory_space<vmem>>, vector<8x8xf32>
    tpu.vector_store %arg6[%c0_8, %c0_9], %22 {strides = array<i32>} : memref<8x32xf32, #tpu.memory_space<vmem>>, vector<8x8xf32>,
    %24 = vector.extract_strided_slice %3 {offsets = [0, 8], sizes = [8, 8], strides = [1, 1]} : vector<8x96xf32> to vector<8x8xf32>
    %25 = vector.extract_strided_slice %3 {offsets = [0, 40], sizes = [8, 8], strides = [1, 1]} : vector<8x96xf32> to vector<8x8xf32>
    %26 = vector.extract_strided_slice %3 {offsets = [0, 72], sizes = [8, 8], strides = [1, 1]} : vector<8x96xf32> to vector<8x8xf32>
    %27 = arith.truncf %24 : vector<8x8xf32> to vector<8x8xbf16>
    %28 = arith.truncf %25 : vector<8x8xf32> to vector<8x8xbf16>
    "tpu.trace_start"() <{level = 10 : i32, message = "qd,kd->qk"}> : () -> ()
    %cst_10 = arith.constant dense<0.000000e+00> : vector<8x8xf32>
    %29 = tpu.matmul %27, %28, %cst_10 {dimension_numbers = #tpu.dot_dimension_numbers<[1], [1], [0], [0], [0, 0, 1, 0], [], []>} : vector<8x8xbf16>, vector<8x8xbf16>, vector<8x8xf32> -> vector<8x8xf32>
    "tpu.trace_stop"() : () -> ()
    %cst_11 = arith.constant dense<0xFF800000> : vector<8xf32>
    %30 = vector.multi_reduction <maximumf>, %29, %cst_11 [1] : vector<8x8xf32> to vector<8xf32>
    %31 = vector.shape_cast %30 : vector<8xf32> to vector<8x1xf32>
    %32 = vector.broadcast %31 : vector<8x1xf32> to vector<8x8xf32>
    %33 = arith.subf %29, %32 : vector<8x8xf32>
    %34 = math.exp %33 : vector<8x8xf32>
    %cst_12 = arith.constant dense<0.000000e+00> : vector<8xf32>
    %35 = vector.multi_reduction <add>, %34, %cst_12 [1] : vector<8x8xf32> to vector<8xf32>
    %36 = vector.shape_cast %35 : vector<8xf32> to vector<8x1xf32>
    %37 = tpu.reciprocal %36 {approx = true} : vector<8x1xf32> -> vector<8x1xf32>
    %38 = vector.broadcast %37 : vector<8x1xf32> to vector<8x8xf32>
    %39 = arith.mulf %34, %38 : vector<8x8xf32>
    %40 = arith.truncf %39 : vector<8x8xf32> to vector<8x8xbf16>
    %41 = arith.truncf %26 : vector<8x8xf32> to vector<8x8xbf16>
    %cst_13 = arith.constant dense<0.000000e+00> : vector<8x8xf32>
    %42 = tpu.matmul %40, %41, %cst_13 {dimension_numbers = #tpu.dot_dimension_numbers<[1], [0], [0], [1], [0, 0, 1, 1], [], []>} : vector<8x8xbf16>, vector<8x8xbf16>, vector<8x8xf32> -> vector<8x8xf32>
    %c0_14 = arith.constant 0 : index
    %c8 = arith.constant 8 : index
    %43 = vector.load %arg6[%c0_14, %c8] : memref<8x32xf32, #tpu.memory_space<vmem>>, vector<8x8xf32>
    tpu.vector_store %arg6[%c0_14, %c8], %42 {strides = array<i32>} : memref<8x32xf32, #tpu.memory_space<vmem>>, vector<8x8xf32>,
    %44 = vector.extract_strided_slice %3 {offsets = [0, 16], sizes = [8, 8], strides = [1, 1]} : vector<8x96xf32> to vector<8x8xf32>
    %45 = vector.extract_strided_slice %3 {offsets = [0, 48], sizes = [8, 8], strides = [1, 1]} : vector<8x96xf32> to vector<8x8xf32>
    %46 = vector.extract_strided_slice %3 {offsets = [0, 80], sizes = [8, 8], strides = [1, 1]} : vector<8x96xf32> to vector<8x8xf32>
    %47 = arith.truncf %44 : vector<8x8xf32> to vector<8x8xbf16>
    %48 = arith.truncf %45 : vector<8x8xf32> to vector<8x8xbf16>
    "tpu.trace_start"() <{level = 10 : i32, message = "qd,kd->qk"}> : () -> ()
    %cst_15 = arith.constant dense<0.000000e+00> : vector<8x8xf32>
    %49 = tpu.matmul %47, %48, %cst_15 {dimension_numbers = #tpu.dot_dimension_numbers<[1], [1], [0], [0], [0, 0, 1, 0], [], []>} : vector<8x8xbf16>, vector<8x8xbf16>, vector<8x8xf32> -> vector<8x8xf32>
    "tpu.trace_stop"() : () -> ()
    %cst_16 = arith.constant dense<0xFF800000> : vector<8xf32>
    %50 = vector.multi_reduction <maximumf>, %49, %cst_16 [1] : vector<8x8xf32> to vector<8xf32>
    %51 = vector.shape_cast %50 : vector<8xf32> to vector<8x1xf32>
    %52 = vector.broadcast %51 : vector<8x1xf32> to vector<8x8xf32>
    %53 = arith.subf %49, %52 : vector<8x8xf32>
    %54 = math.exp %53 : vector<8x8xf32>
    %cst_17 = arith.constant dense<0.000000e+00> : vector<8xf32>
    %55 = vector.multi_reduction <add>, %54, %cst_17 [1] : vector<8x8xf32> to vector<8xf32>
    %56 = vector.shape_cast %55 : vector<8xf32> to vector<8x1xf32>
    %57 = tpu.reciprocal %56 {approx = true} : vector<8x1xf32> -> vector<8x1xf32>
    %58 = vector.broadcast %57 : vector<8x1xf32> to vector<8x8xf32>
    %59 = arith.mulf %54, %58 : vector<8x8xf32>
    %60 = arith.truncf %59 : vector<8x8xf32> to vector<8x8xbf16>
    %61 = arith.truncf %46 : vector<8x8xf32> to vector<8x8xbf16>
    %cst_18 = arith.constant dense<0.000000e+00> : vector<8x8xf32>
    %62 = tpu.matmul %60, %61, %cst_18 {dimension_numbers = #tpu.dot_dimension_numbers<[1], [0], [0], [1], [0, 0, 1, 1], [], []>} : vector<8x8xbf16>, vector<8x8xbf16>, vector<8x8xf32> -> vector<8x8xf32>
    %c0_19 = arith.constant 0 : index
    %c16 = arith.constant 16 : index
    %63 = vector.load %arg6[%c0_19, %c16] : memref<8x32xf32, #tpu.memory_space<vmem>>, vector<8x8xf32>
    tpu.vector_store %arg6[%c0_19, %c16], %62 {strides = array<i32>} : memref<8x32xf32, #tpu.memory_space<vmem>>, vector<8x8xf32>,
    %64 = vector.extract_strided_slice %3 {offsets = [0, 24], sizes = [8, 8], strides = [1, 1]} : vector<8x96xf32> to vector<8x8xf32>
    %65 = vector.extract_strided_slice %3 {offsets = [0, 56], sizes = [8, 8], strides = [1, 1]} : vector<8x96xf32> to vector<8x8xf32>
    %66 = vector.extract_strided_slice %3 {offsets = [0, 88], sizes = [8, 8], strides = [1, 1]} : vector<8x96xf32> to vector<8x8xf32>
    %67 = arith.truncf %64 : vector<8x8xf32> to vector<8x8xbf16>
    %68 = arith.truncf %65 : vector<8x8xf32> to vector<8x8xbf16>
    "tpu.trace_start"() <{level = 10 : i32, message = "qd,kd->qk"}> : () -> ()
    %cst_20 = arith.constant dense<0.000000e+00> : vector<8x8xf32>
    %69 = tpu.matmul %67, %68, %cst_20 {dimension_numbers = #tpu.dot_dimension_numbers<[1], [1], [0], [0], [0, 0, 1, 0], [], []>} : vector<8x8xbf16>, vector<8x8xbf16>, vector<8x8xf32> -> vector<8x8xf32>
    "tpu.trace_stop"() : () -> ()
    %cst_21 = arith.constant dense<0xFF800000> : vector<8xf32>
    %70 = vector.multi_reduction <maximumf>, %69, %cst_21 [1] : vector<8x8xf32> to vector<8xf32>
    %71 = vector.shape_cast %70 : vector<8xf32> to vector<8x1xf32>
    %72 = vector.broadcast %71 : vector<8x1xf32> to vector<8x8xf32>
    %73 = arith.subf %69, %72 : vector<8x8xf32>
    %74 = math.exp %73 : vector<8x8xf32>
    %cst_22 = arith.constant dense<0.000000e+00> : vector<8xf32>
    %75 = vector.multi_reduction <add>, %74, %cst_22 [1] : vector<8x8xf32> to vector<8xf32>
    %76 = vector.shape_cast %75 : vector<8xf32> to vector<8x1xf32>
    %77 = tpu.reciprocal %76 {approx = true} : vector<8x1xf32> -> vector<8x1xf32>
    %78 = vector.broadcast %77 : vector<8x1xf32> to vector<8x8xf32>
    %79 = arith.mulf %74, %78 : vector<8x8xf32>
    %80 = arith.truncf %79 : vector<8x8xf32> to vector<8x8xbf16>
    %81 = arith.truncf %66 : vector<8x8xf32> to vector<8x8xbf16>
    %cst_23 = arith.constant dense<0.000000e+00> : vector<8x8xf32>
    %82 = tpu.matmul %80, %81, %cst_23 {dimension_numbers = #tpu.dot_dimension_numbers<[1], [0], [0], [1], [0, 0, 1, 1], [], []>} : vector<8x8xbf16>, vector<8x8xbf16>, vector<8x8xf32> -> vector<8x8xf32>
    %c0_24 = arith.constant 0 : index
    %c24 = arith.constant 24 : index
    %83 = vector.load %arg6[%c0_24, %c24] : memref<8x32xf32, #tpu.memory_space<vmem>>, vector<8x8xf32>
    tpu.vector_store %arg6[%c0_24, %c24], %82 {strides = array<i32>} : memref<8x32xf32, #tpu.memory_space<vmem>>, vector<8x8xf32>,
    %c0_25 = arith.constant 0 : index
    %c0_26 = arith.constant 0 : index
    %84 = vector.load %arg6[%c0_25, %c0_26] : memref<8x32xf32, #tpu.memory_space<vmem>>, vector<8x32xf32>
    %85 = arith.truncf %84 : vector<8x32xf32> to vector<8x32xbf16>
    %c0_27 = arith.constant 0 : index
    %c0_28 = arith.constant 0 : index
    %86 = vector.load %arg3[%c0_27, %c0_28] : memref<32x128xbf16, #tpu.memory_space<vmem>>, vector<32x128xbf16>
    %cst_29 = arith.constant dense<0.000000e+00> : vector<8x128xf32>
    %87 = tpu.matmul %85, %86, %cst_29 {dimension_numbers = #tpu.dot_dimension_numbers<[1], [0], [0], [1], [0, 0, 1, 1], [], []>} : vector<8x32xbf16>, vector<32x128xbf16>, vector<8x128xf32> -> vector<8x128xf32>
    %c0_30 = arith.constant 0 : index
    %c0_31 = arith.constant 0 : index
    %88 = vector.load %arg4[%c0_30, %c0_31] : memref<1x128xf32, #tpu.memory_space<vmem>>, vector<1x128xf32>
    %89 = vector.broadcast %88 : vector<1x128xf32> to vector<8x128xf32>
    %90 = arith.addf %87, %89 : vector<8x128xf32>
    %c0_32 = arith.constant 0 : index
    %c0_33 = arith.constant 0 : index
    %c0_34 = arith.constant 0 : index
    %91 = vector.load %arg5[%c0_32, %c0_33, %c0_34] : memref<1x8x128xf32, #tpu.memory_space<vmem>>, vector<1x8x128xf32>
    %92 = vector.shape_cast %91 : vector<1x8x128xf32> to vector<8x128xf32>
    %93 = vector.shape_cast %90 : vector<8x128xf32> to vector<1x8x128xf32>
    tpu.vector_store %arg5[%c0_32, %c0_33, %c0_34], %93 {strides = array<i32>} : memref<1x8x128xf32, #tpu.memory_space<vmem>>, vector<1x8x128xf32>,
    return
  }
  func.func @transform_0(%arg0: i32) -> (i32, i32, i32) {
    %c0_i32 = arith.constant 0 : i32
    %c0_i32_0 = arith.constant 0 : i32
    %c0_i32_1 = arith.constant 0 : i32
    return %arg0, %c0_i32, %c0_i32_0 : i32, i32, i32
  }
  func.func @transform_1(%arg0: i32) -> (i32, i32) {
    %c0_i32 = arith.constant 0 : i32
    %c0_i32_0 = arith.constant 0 : i32
    %c0_i32_1 = arith.constant 0 : i32
    return %c0_i32, %c0_i32_0 : i32, i32
  }
  func.func @transform_2(%arg0: i32) -> (i32, i32) {
    %c0_i32 = arith.constant 0 : i32
    %c0_i32_0 = arith.constant 0 : i32
    %c0_i32_1 = arith.constant 0 : i32
    return %c0_i32, %c0_i32_0 : i32, i32
  }
  func.func @transform_3(%arg0: i32) -> (i32, i32) {
    %c0_i32 = arith.constant 0 : i32
    %c0_i32_0 = arith.constant 0 : i32
    %c0_i32_1 = arith.constant 0 : i32
    return %c0_i32, %c0_i32_0 : i32, i32
  }
  func.func @transform_4(%arg0: i32) -> (i32, i32, i32) {
    %c0_i32 = arith.constant 0 : i32
    %c0_i32_0 = arith.constant 0 : i32
    %c0_i32_1 = arith.constant 0 : i32
    return %arg0, %c0_i32, %c0_i32_0 : i32, i32, i32
  }
}

</mosaic_0001>

<llo_original>
// kernel: tpu_custom_call.1
$region0: #{tpu_custom_call.1}
  #allocation0 [shape = 'u32[]', space=smem, size = 0x4, offset = 0x4, fixed_abs, tag = 'smem constant byte address 0x4 - core index']
  #allocation1 [shape = 'u32[144,128]{1,0:T(1,128)}', space=vmem, size = 0x12000, scoped, tag = 'internal scratch']
  #allocation2 [shape = 'f32[8,32]{1,0:T(8,128)}', space=vmem, size = 0x1000, scoped, tag = 'scratch operand']
  %s0 = inlined_call_operand.hbm [shape: bf16[2,8,32], index: 0, kind: input, shape index: {}]
  %s1 = inlined_call_operand.hbm [shape: bf16[32,96], index: 1, kind: input, shape index: {}]
  %s2 = inlined_call_operand.hbm [shape: bf16[32,128], index: 2, kind: input, shape index: {}]
  %s3 = inlined_call_operand.vmem [shape: f32[1,128], index: 3, kind: input, shape index: {}]
  %s4 = inlined_call_operand.hbm [shape: f32[2,8,128], index: 4, kind: output, shape index: {}]
  %s5 = sld [smem:[#allocation0]]
  $region61: #{tpu_custom_call.1} parent=0
    _
  %s7 = ssub.s32 1, %s5
  %s8 = scalar_select 0, %s7, %s5
  $region1: #{tpu_custom_call.1} parent=0
    #allocation3 [shape = 'u8[4096]{0}', space=vmem, size = 0x1000, scoped, tag = 'input window, operand 0']
    #allocation4 [shape = 's32[2]{0}', space=sflag, size = 0x8, scoped, tag = 'scoped memory for tpu_custom_call.1']
    #allocation5 [shape = 's32[2]{0}', space=sflag, size = 0x8, scoped, tag = 'scoped memory for tpu_custom_call.1']
    #allocation6 [shape = 'u8[8192]{0}', space=vmem, size = 0x2000, scoped, tag = 'input window, operand 1, single buffered']
    #allocation7 [shape = 's32[1]{0}', space=sflag, size = 0x4, scoped, tag = 'scoped memory for tpu_custom_call.1']
    #allocation8 [shape = 'u8[8192]{0}', space=vmem, size = 0x2000, scoped, tag = 'input window, operand 2, single buffered']
    #allocation9 [shape = 'u8[8192]{0}', space=vmem, size = 0x2000, scoped, tag = 'output window, operand 0']
    %9 = vsyncpa [#allocation4], 0
    %s10 = scalar_lea.sflag [#allocation4], 1
    %11 = vsyncpa %s10, 0
    %12 = vsyncpa [#allocation7], 0
    %13 = vsyncpa [#allocation5], 0
    %s14 = scalar_lea.sflag [#allocation5], 1
    %15 = vsyncpa %s14, 0
    loop: start=0, step=1, limit=4
    $region2: #{tpu_custom_call.1} parent=1 // loop_pre_header
      _
    $region3: #{tpu_custom_call.1} parent=1 // loop_header
      %s17 = sphi 0, %s21
      %p18 = scmp.ge.s32.totalorder %s17, 4
      %s27 = sphi 0, %s29
      %s30 = sphi 0, %s27
      %s31 = sphi 0, %s30
      %s47 = sphi 0, %s31
      %s51 = sphi 0, %s51
      %s53 = sphi 0, %s51
      %s54 = sphi 0, %s53
      %s68 = sphi 0, %s54
      %s72 = sphi 0, %s72
      %s74 = sphi 0, %s72
      %s75 = sphi 0, %s74
      %s89 = sphi 0, %s75
      %s93 = sphi 0, %s93
      %s95 = sphi 0, %s93
      %s96 = sphi 0, %s95
      %s110 = sphi 0, %s96
      %s116 = sphi 0, %s118
      %s119 = sphi 0, %s116
      %s120 = sphi 0, %s119
      %s136 = sphi 0, %s120
    $region4: #{tpu_custom_call.1} parent=1 // loop_header_branch
      %20 = sbr.rel (%p18) target = $region8
    $region5: #{tpu_custom_call.1} parent=1 // loop_body
      %s22 = ssub.s32 %s17, 1
      %s23 = ssub.s32 %s17, 2
      %s24 = sadd.s32 %s17, 1
      %s25 = ssub.s32 %s17, %s24
      %p26 = scmp.eq.s32.totalorder %s25, 0
      %s28 = sadd.s32 %s27, 1
      %s29 = scalar_select %p26, %s27, %s28
      %p32 = pneg %p26
      %p33 = scmp.eq.s32.totalorder %s17, 1
      %p34 = por %p32, %p33
      %p35 = scmp.ne.s32.totalorder %s27, %s30
      %p36 = scmp.eq.s32.totalorder %s17, 0
      %p37 = por %p35, %p36
      %p38 = scmp.ne.s32.totalorder %s27, %s30
      %p39 = scmp.eq.s32.totalorder %s22, 1
      %p40 = por %p38, %p39
      %p41 = scmp.ne.s32.totalorder %s30, %s31
      %p42 = scmp.eq.s32.totalorder %s22, 0
      %p43 = por %p41, %p42
      %p44 = scmp.ne.s32.totalorder %s30, %s31
      %p45 = scmp.eq.s32.totalorder %s23, 1
      %p46 = por %p44, %p45
      %p48 = scmp.ne.s32.totalorder %s31, %s47
      %p49 = scmp.eq.s32.totalorder %s23, 0
      %p50 = por %p48, %p49
      %s52 = sadd.s32 %s51, 1
      %p55 = scmp.eq.s32.totalorder %s17, 1
      %p56 = scmp.ne.s32.totalorder %s51, %s53
      %p57 = scmp.eq.s32.totalorder %s17, 0
      %p58 = por %p56, %p57
      %p59 = scmp.ne.s32.totalorder %s51, %s53
      %p60 = scmp.eq.s32.totalorder %s22, 1
      %p61 = por %p59, %p60
      %p62 = scmp.ne.s32.totalorder %s53, %s54
      %p63 = scmp.eq.s32.totalorder %s22, 0
      %p64 = por %p62, %p63
      %p65 = scmp.ne.s32.totalorder %s53, %s54
      %p66 = scmp.eq.s32.totalorder %s23, 1
      %p67 = por %p65, %p66
      %p69 = scmp.ne.s32.totalorder %s54, %s68
      %p70 = scmp.eq.s32.totalorder %s23, 0
      %p71 = por %p69, %p70
      %s73 = sadd.s32 %s72, 1
      %p76 = scmp.eq.s32.totalorder %s17, 1
      %p77 = scmp.ne.s32.totalorder %s72, %s74
      %p78 = scmp.eq.s32.totalorder %s17, 0
      %p79 = por %p77, %p78
      %p80 = scmp.ne.s32.totalorder %s72, %s74
      %p81 = scmp.eq.s32.totalorder %s22, 1
      %p82 = por %p80, %p81
      %p83 = scmp.ne.s32.totalorder %s74, %s75
      %p84 = scmp.eq.s32.totalorder %s22, 0
      %p85 = por %p83, %p84
      %p86 = scmp.ne.s32.totalorder %s74, %s75
      %p87 = scmp.eq.s32.totalorder %s23, 1
      %p88 = por %p86, %p87
      %p90 = scmp.ne.s32.totalorder %s75, %s89
      %p91 = scmp.eq.s32.totalorder %s23, 0
      %p92 = por %p90, %p91
      %s94 = sadd.s32 %s93, 1
      %p97 = scmp.eq.s32.totalorder %s17, 1
      %p98 = scmp.ne.s32.totalorder %s93, %s95
      %p99 = scmp.eq.s32.totalorder %s17, 0
      %p100 = por %p98, %p99
      %p101 = scmp.ne.s32.totalorder %s93, %s95
      %p102 = scmp.eq.s32.totalorder %s22, 1
      %p103 = por %p101, %p102
      %p104 = scmp.ne.s32.totalorder %s95, %s96
      %p105 = scmp.eq.s32.totalorder %s22, 0
      %p106 = por %p104, %p105
      %p107 = scmp.ne.s32.totalorder %s95, %s96
      %p108 = scmp.eq.s32.totalorder %s23, 1
      %p109 = por %p107, %p108
      %p111 = scmp.ne.s32.totalorder %s96, %s110
      %p112 = scmp.eq.s32.totalorder %s23, 0
      %p113 = por %p111, %p112
      %s114 = ssub.s32 %s17, %s24
      %p115 = scmp.eq.s32.totalorder %s114, 0
      %s117 = sadd.s32 %s116, 1
      %s118 = scalar_select %p115, %s116, %s117
      %p121 = pneg %p115
      %p122 = scmp.eq.s32.totalorder %s17, 1
      %p123 = por %p121, %p122
      %p124 = scmp.ne.s32.totalorder %s116, %s119
      %p125 = scmp.eq.s32.totalorder %s17, 0
      %p126 = por %p124, %p125
      %p127 = scmp.ne.s32.totalorder %s116, %s119
      %p128 = scmp.eq.s32.totalorder %s22, 1
      %p129 = por %p127, %p128
      %p130 = scmp.ne.s32.totalorder %s119, %s120
      %p131 = scmp.eq.s32.totalorder %s22, 0
      %p132 = por %p130, %p131
      %p133 = scmp.ne.s32.totalorder %s119, %s120
      %p134 = scmp.eq.s32.totalorder %s23, 1
      %p135 = por %p133, %p134
      %p137 = scmp.ne.s32.totalorder %s120, %s136
      %p138 = scmp.eq.s32.totalorder %s23, 0
      %p139 = por %p137, %p138
      %p140 = scmp.le.s32.totalorder 1, %s17
      %p141 = scmp.lt.s32.totalorder %s17, 3
      %p142 = pnand %p140, %p141
      %p143 = pneg %p142
      // Predicated region
      $region9: #{tpu_custom_call.1} parent=5 // pred_check
        _
      $region10: #{tpu_custom_call.1} parent=5 // pred_check_branch
        %145 = sbr.rel (%p142) target = $region12
      $region11: #{tpu_custom_call.1} parent=5 // pred_region
        %s146 = ssub.s32 %s17, 1
        // Predicated region
        $region13: #{tpu_custom_call.1} parent=11 // pred_check
          %p147 = pneg %p64
        $region14: #{tpu_custom_call.1} parent=11 // pred_check_branch
          %149 = sbr.rel (%p147) target = $region16
        $region15: #{tpu_custom_call.1} parent=11 // pred_region
          %s151 = ssub.s32 256, 256
          %152 = vsyncadd [#allocation7], %s151
          %s153 = sshll.u32 [#allocation6], 4
          %s154 = int_to_ptr.vmem [resolvable:$true] %s153
          %159 = dma.hbm_to_vmem [thread:$0]  %s1, 256, %s154, [#allocation7], 64, 64, 4
        $region16: #{tpu_custom_call.1} parent=11 // pred_fallthru
          _
        // Predicated region
        $region17: #{tpu_custom_call.1} parent=11 // pred_check
          %p160 = pneg %p85
        $region18: #{tpu_custom_call.1} parent=11 // pred_check_branch
          %162 = sbr.rel (%p160) target = $region20
        $region19: #{tpu_custom_call.1} parent=11 // pred_region
          %s164 = ssub.s32 256, 256
          %165 = vsyncadd [#allocation7], %s164
          %s166 = sshll.u32 [#allocation8], 4
          %s167 = int_to_ptr.vmem [resolvable:$true] %s166
          %172 = dma.hbm_to_vmem [thread:$0]  %s2, 256, %s167, [#allocation7], 64, 64, 4
        $region20: #{tpu_custom_call.1} parent=11 // pred_fallthru
          _
        // Predicated region
        $region21: #{tpu_custom_call.1} parent=11 // pred_check
          %p173 = pneg %p106
        $region22: #{tpu_custom_call.1} parent=11 // pred_check_branch
          %175 = sbr.rel (%p173) target = $region24
        $region23: #{tpu_custom_call.1} parent=11 // pred_region
          _
        $region24: #{tpu_custom_call.1} parent=11 // pred_fallthru
          _
      $region12: #{tpu_custom_call.1} parent=5 // pred_fallthru
        _
      %p176 = scmp.lt.s32.totalorder %s17, 2
      // Predicated region
      $region25: #{tpu_custom_call.1} parent=5 // pred_check
        %p177 = pneg %p176
      $region26: #{tpu_custom_call.1} parent=5 // pred_check_branch
        %179 = sbr.rel (%p177) target = $region28
      $region27: #{tpu_custom_call.1} parent=5 // pred_region
        // Predicated region
        $region29: #{tpu_custom_call.1} parent=27 // pred_check
          %p180 = pneg %p37
        $region30: #{tpu_custom_call.1} parent=27 // pred_check_branch
          %182 = sbr.rel (%p180) target = $region32
        $region31: #{tpu_custom_call.1} parent=27 // pred_region
          %s183 = sand.u32 %s27, 1
          %s184 = scalar_lea.sflag [#allocation4], %s183
          %s185 = sand.u32 %s27, 1
          %s186 = smul.addr %s185, 4
          %s187 = scalar_lea.vmem [#allocation3], %s186
          %s189 = ssub.s32 64, 64
          %190 = vsyncadd %s184, %s189
          %s191 = smul.addr %s17, 64
          %s192 = scalar_lea.hbm %s0, %s191
          %s194 = sshll.u32 %s187, 4
          %s195 = int_to_ptr.vmem [resolvable:$true] %s194
          %197 = dma.hbm_to_vmem [thread:$0]  %s192, 64, %s195, %s184
        $region32: #{tpu_custom_call.1} parent=27 // pred_fallthru
          _
      $region28: #{tpu_custom_call.1} parent=5 // pred_fallthru
        _
      %p198 = scmp.le.s32.totalorder 1, %s17
      %p199 = scmp.lt.s32.totalorder %s17, 3
      %p200 = pnand %p198, %p199
      %p201 = pneg %p200
      // Predicated region
      $region33: #{tpu_custom_call.1} parent=5 // pred_check
        _
      $region34: #{tpu_custom_call.1} parent=5 // pred_check_branch
        %203 = sbr.rel (%p200) target = $region36
      $region35: #{tpu_custom_call.1} parent=5 // pred_region
        %s204 = ssub.s32 %s17, 1
        %s205 = sand.u32 %s30, 1
        %s206 = scalar_lea.sflag [#allocation4], %s205
        %s207 = sand.u32 %s30, 1
        %s208 = smul.addr %s207, 4
        %s209 = scalar_lea.vmem [#allocation3], %s208
        // Predicated region
        $region37: #{tpu_custom_call.1} parent=35 // pred_check
          %p210 = pneg %p43
        $region38: #{tpu_custom_call.1} parent=35 // pred_check_branch
          %212 = sbr.rel (%p210) target = $region40
        $region39: #{tpu_custom_call.1} parent=35 // pred_region
          %213 = dma.done %s206, 64
        $region40: #{tpu_custom_call.1} parent=35 // pred_fallthru
          _
        // Predicated region
        $region41: #{tpu_custom_call.1} parent=35 // pred_check
          %p214 = pneg %p64
        $region42: #{tpu_custom_call.1} parent=35 // pred_check_branch
          %216 = sbr.rel (%p214) target = $region44
        $region43: #{tpu_custom_call.1} parent=35 // pred_region
          %217 = dma.done [#allocation7], 256
        $region44: #{tpu_custom_call.1} parent=35 // pred_fallthru
          _
        // Predicated region
        $region45: #{tpu_custom_call.1} parent=35 // pred_check
          %p218 = pneg %p85
        $region46: #{tpu_custom_call.1} parent=35 // pred_check_branch
          %220 = sbr.rel (%p218) target = $region48
        $region47: #{tpu_custom_call.1} parent=35 // pred_region
          %221 = dma.done [#allocation7], 256
        $region48: #{tpu_custom_call.1} parent=35 // pred_fallthru
          _
        %s222 = sand.u32 %s30, 1
        %s223 = scalar_lea.sflag [#allocation4], %s222
        %s224 = sand.u32 %s30, 1
        %s225 = smul.addr %s224, 4
        %s226 = scalar_lea.vmem [#allocation3], %s225
        %p227 = pneg %p43
        %p228 = pneg %p40
        %p229 = pneg %p64
        %p230 = pneg %p61
        %p231 = pneg %p85
        %p232 = pneg %p82
        %p233 = pneg %p106
        %p234 = pneg %p103
        %p235 = pneg %p132
        %p236 = pneg %p129
        %s237 = sand.u32 %s119, 1
        %s238 = scalar_lea.sflag [#allocation5], %s237
        %s239 = sand.u32 %s119, 1
        %s240 = smul.addr %s239, 8
        %s241 = scalar_lea.vmem [#allocation9], %s240
        %v243 = vld [vmem:[%s209] sm:$0xf]
        %v244 = vld [vmem:[#allocation6] sm:$0xf]
        %v245 = vld [vmem:[#allocation6 + $0x4] sm:$0xf]
        %v246 = vld [vmem:[#allocation6 + $0x8] sm:$0xf]
        %v247 = vld [vmem:[#allocation6 + $0xc] sm:$0xf]
        %v252 = vunpack.c.l.b16 %v244
        %v253 = vunpack.c.l.b16 %v245
        %v254 = vunpack.c.l.b16 %v246
        %v255 = vunpack.c.l.b16 %v247
        %v256 = vpack.c.b16 %v253, %v252
        %v257 = vpack.c.b16 %v255, %v254
        %vm260 = vcmask 261120
        %v262 = vsel %vm260, %v243, 0
        %264 = vmatprep.subr.bf16.mxu0 0
        %265 = vmatpush1.bf16.msra.mxu0 %v256
        %266 = vmatprep.subr.bf16.mxu0 0
        %267 = vmatpush1.bf16.msra.mxu0 %v257
        %268 = vmatprep.subr.bf16.mxu0 0
        %269 = vmatpush1.bf16.msra.mxu0 0
        %270 = vmatprep.subr.bf16.mxu0 0
        %271 = vmatpush1.bf16.msra.mxu0 0
        %272 = vmatprep.subr.bf16.mxu0 0
        %273 = vmatpush1.bf16.msra.mxu0 0
        %274 = vmatprep.subr.bf16.mxu0 0
        %275 = vmatpush1.bf16.msra.mxu0 0
        %276 = vmatprep.subr.bf16.mxu0 0
        %277 = vmatpush1.bf16.msra.mxu0 0
        %278 = vmatprep.subr.bf16.mxu0 0
        %279 = vmatpush1.bf16.msra.mxu0 0
        %280 = vmatprep.subr.bf16.mxu0 0
        %281 = vmatpush1.bf16.msra.mxu0 0
        %282 = vmatprep.subr.bf16.mxu0 0
        %283 = vmatpush1.bf16.msra.mxu0 0
        %284 = vmatprep.subr.bf16.mxu0 0
        %285 = vmatpush1.bf16.msra.mxu0 0
        %286 = vmatprep.subr.bf16.mxu0 0
        %287 = vmatpush1.bf16.msra.mxu0 0
        %288 = vmatprep.subr.bf16.mxu0 0
        %289 = vmatpush1.bf16.msra.mxu0 0
        %290 = vmatprep.subr.bf16.mxu0 0
        %291 = vmatpush1.bf16.msra.mxu0 0
        %292 = vmatprep.subr.bf16.mxu0 0
        %293 = vmatpush1.bf16.msra.mxu0 0
        %294 = vmatprep.subr.bf16.mxu0 0
        %295 = vmatpush1.bf16.msra.mxu0 0
        %296 = vmatprep.mubr.bf16.mxu0 0
        %297 = vmatmul.mubr.bf16.gmra.mrb[0].mxu0 %v262
        %v298 = vpop.f32.mrb[0].mxu0
        %v299 = vadd.f32 0.0, %v298
        %v300 = vpop.f32.mrb[0].mxu0
        %v301 = vpop.f32.mrb[0].mxu0
        %v302 = vpop.f32.mrb[0].mxu0
        %303 = vdwg.mxu0
        %v304 = vpack.c.bf16 %v299, %v299
        %306 = vrot.lane.b32.xlu0 %v304, 96
        %v307 = vpop.permute.xlu0 %306
        %vm308 = vcmask 64512
        %v310 = vsel %vm308, %v304, 0
        %v313 = vsel %vm308, %v307, 0
        %315 = vmatprep.subr.bf16.mxu0 0
        %316 = vmatpush1.bf16.xpose.msra.mxu0 %v313
        %317 = vmatprep.subr.bf16.mxu0 0
        %318 = vmatpush1.bf16.xpose.msra.mxu0 0
        %319 = vmatprep.subr.bf16.mxu0 0
        %320 = vmatpush1.bf16.xpose.msra.mxu0 0
        %321 = vmatprep.subr.bf16.mxu0 0
        %322 = vmatpush1.bf16.xpose.msra.mxu0 0
        %323 = vmatprep.subr.bf16.mxu0 0
        %324 = vmatpush1.bf16.xpose.msra.mxu0 0
        %325 = vmatprep.subr.bf16.mxu0 0
        %326 = vmatpush1.bf16.xpose.msra.mxu0 0
        %327 = vmatprep.subr.bf16.mxu0 0
        %328 = vmatpush1.bf16.xpose.msra.mxu0 0
        %329 = vmatprep.subr.bf16.mxu0 0
        %330 = vmatpush1.bf16.xpose.msra.mxu0 0
        %331 = vmatprep.subr.bf16.mxu0 0
        %332 = vmatpush1.bf16.xpose.msra.mxu0 0
        %333 = vmatprep.subr.bf16.mxu0 0
        %334 = vmatpush1.bf16.xpose.msra.mxu0 0
        %335 = vmatprep.subr.bf16.mxu0 0
        %336 = vmatpush1.bf16.xpose.msra.mxu0 0
        %337 = vmatprep.subr.bf16.mxu0 0
        %338 = vmatpush1.bf16.xpose.msra.mxu0 0
        %339 = vmatprep.subr.bf16.mxu0 0
        %340 = vmatpush1.bf16.xpose.msra.mxu0 0
        %341 = vmatprep.subr.bf16.mxu0 0
        %342 = vmatpush1.bf16.xpose.msra.mxu0 0
        %343 = vmatprep.subr.bf16.mxu0 0
        %344 = vmatpush1.bf16.xpose.msra.mxu0 0
        %345 = vmatprep.subr.bf16.mxu0 0
        %346 = vmatpush1.bf16.xpose.msra.mxu0 0
        %347 = vmatprep.mubr.bf16.mxu0 0
        %348 = vmatmul.mubr.bf16.gmra.mrb[0].mxu0 %v310
        %v349 = vpop.f32.mrb[0].mxu0
        %v350 = vadd.f32 0.0, %v349
        %v351 = vpop.f32.mrb[0].mxu0
        %v352 = vpop.f32.mrb[0].mxu0
        %v353 = vpop.f32.mrb[0].mxu0
        %354 = vdwg.mxu0
        %v355 = vsel %vm308, %v350, -inf
        %356 = vmax.xlane.f32.xlu0 %v355
        %v357 = vpop.xlane.xlu0 %356
        %v358 = vsub.f32 %v350, %v357
        %v359 = vmul.f32 %v358, 1.442695
        %v360 = vpow.pop %v359
        %v361 = vsel %vm308, %v360, 0.0
        %362 = vadd.xlane.f32.xlu0 %v361
        %v363 = vpop.xlane.xlu0 %362
        %v364 = vrcp.pop %v363
        %v365 = vmul.f32 %v360, %v364
        %v366 = vpack.c.bf16 %v365, %v365
        %367 = vrot.lane.b32.xlu0 %v304, 64
        %v368 = vpop.permute.xlu0 %367
        %v370 = vsel %vm308, %v366, 0
        %vm372 = vcmask 1043456
        %v374 = vsel %vm372, %v368, 0
        %376 = vmatprep.subr.bf16.mxu0 0
        %377 = vmatpush1.bf16.msra.mxu0 %v374
        %378 = vmatprep.subr.bf16.mxu0 0
        %379 = vmatpush1.bf16.msra.mxu0 0
        %380 = vmatprep.subr.bf16.mxu0 0
        %381 = vmatpush1.bf16.msra.mxu0 0
        %382 = vmatprep.subr.bf16.mxu0 0
        %383 = vmatpush1.bf16.msra.mxu0 0
        %384 = vmatprep.subr.bf16.mxu0 0
        %385 = vmatpush1.bf16.msra.mxu0 0
        %386 = vmatprep.subr.bf16.mxu0 0
        %387 = vmatpush1.bf16.msra.mxu0 0
        %388 = vmatprep.subr.bf16.mxu0 0
        %389 = vmatpush1.bf16.msra.mxu0 0
        %390 = vmatprep.subr.bf16.mxu0 0
        %391 = vmatpush1.bf16.msra.mxu0 0
        %392 = vmatprep.subr.bf16.mxu0 0
        %393 = vmatpush1.bf16.msra.mxu0 0
        %394 = vmatprep.subr.bf16.mxu0 0
        %395 = vmatpush1.bf16.msra.mxu0 0
        %396 = vmatprep.subr.bf16.mxu0 0
        %397 = vmatpush1.bf16.msra.mxu0 0
        %398 = vmatprep.subr.bf16.mxu0 0
        %399 = vmatpush1.bf16.msra.mxu0 0
        %400 = vmatprep.subr.bf16.mxu0 0
        %401 = vmatpush1.bf16.msra.mxu0 0
        %402 = vmatprep.subr.bf16.mxu0 0
        %403 = vmatpush1.bf16.msra.mxu0 0
        %404 = vmatprep.subr.bf16.mxu0 0
        %405 = vmatpush1.bf16.msra.mxu0 0
        %406 = vmatprep.subr.bf16.mxu0 0
        %407 = vmatpush1.bf16.msra.mxu0 0
        %408 = vmatprep.mubr.bf16.mxu0 0
        %409 = vmatmul.mubr.bf16.gmra.mrb[0].mxu0 %v370
        %v410 = vpop.f32.mrb[0].mxu0
        %v411 = vadd.f32 0.0, %v410
        %v412 = vpop.f32.mrb[0].mxu0
        %v413 = vpop.f32.mrb[0].mxu0
        %v414 = vpop.f32.mrb[0].mxu0
        %415 = vdwg.mxu0
        %416 = vst.msk [vmem:[#allocation2] sm:$0xff] %vm308, %v411
        %417 = vrot.lane.b32.xlu0 %v304, 120
        %v418 = vpop.permute.xlu0 %417
        %419 = vrot.lane.b32.xlu0 %v304, 88
        %v420 = vpop.permute.xlu0 %419
        %v422 = vsel %vm308, %v418, 0
        %v425 = vsel %vm308, %v420, 0
        %427 = vmatprep.subr.bf16.mxu0 0
        %428 = vmatpush1.bf16.xpose.msra.mxu0 %v425
        %429 = vmatprep.subr.bf16.mxu0 0
        %430 = vmatpush1.bf16.xpose.msra.mxu0 0
        %431 = vmatprep.subr.bf16.mxu0 0
        %432 = vmatpush1.bf16.xpose.msra.mxu0 0
        %433 = vmatprep.subr.bf16.mxu0 0
        %434 = vmatpush1.bf16.xpose.msra.mxu0 0
        %435 = vmatprep.subr.bf16.mxu0 0
        %436 = vmatpush1.bf16.xpose.msra.mxu0 0
        %437 = vmatprep.subr.bf16.mxu0 0
        %438 = vmatpush1.bf16.xpose.msra.mxu0 0
        %439 = vmatprep.subr.bf16.mxu0 0
        %440 = vmatpush1.bf16.xpose.msra.mxu0 0
        %441 = vmatprep.subr.bf16.mxu0 0
        %442 = vmatpush1.bf16.xpose.msra.mxu0 0
        %443 = vmatprep.subr.bf16.mxu0 0
        %444 = vmatpush1.bf16.xpose.msra.mxu0 0
        %445 = vmatprep.subr.bf16.mxu0 0
        %446 = vmatpush1.bf16.xpose.msra.mxu0 0
        %447 = vmatprep.subr.bf16.mxu0 0
        %448 = vmatpush1.bf16.xpose.msra.mxu0 0
        %449 = vmatprep.subr.bf16.mxu0 0
        %450 = vmatpush1.bf16.xpose.msra.mxu0 0
        %451 = vmatprep.subr.bf16.mxu0 0
        %452 = vmatpush1.bf16.xpose.msra.mxu0 0
        %453 = vmatprep.subr.bf16.mxu0 0
        %454 = vmatpush1.bf16.xpose.msra.mxu0 0
        %455 = vmatprep.subr.bf16.mxu0 0
        %456 = vmatpush1.bf16.xpose.msra.mxu0 0
        %457 = vmatprep.subr.bf16.mxu0 0
        %458 = vmatpush1.bf16.xpose.msra.mxu0 0
        %459 = vmatprep.mubr.bf16.mxu0 0
        %460 = vmatmul.mubr.bf16.gmra.mrb[0].mxu0 %v422
        %v461 = vpop.f32.mrb[0].mxu0
        %v462 = vadd.f32 0.0, %v461
        %v463 = vpop.f32.mrb[0].mxu0
        %v464 = vpop.f32.mrb[0].mxu0
        %v465 = vpop.f32.mrb[0].mxu0
        %466 = vdwg.mxu0
        %v467 = vsel %vm308, %v462, -inf
        %468 = vmax.xlane.f32.xlu0 %v467
        %v469 = vpop.xlane.xlu0 %468
        %v470 = vsub.f32 %v462, %v469
        %v471 = vmul.f32 %v470, 1.442695
        %v472 = vpow.pop %v471
        %v473 = vsel %vm308, %v472, 0.0
        %474 = vadd.xlane.f32.xlu0 %v473
        %v475 = vpop.xlane.xlu0 %474
        %v476 = vrcp.pop %v475
        %v477 = vmul.f32 %v472, %v476
        %v478 = vpack.c.bf16 %v477, %v477
        %479 = vrot.lane.b32.xlu0 %v304, 56
        %v480 = vpop.permute.xlu0 %479
        %v482 = vsel %vm308, %v478, 0
        %v485 = vsel %vm372, %v480, 0
        %487 = vmatprep.subr.bf16.mxu0 0
        %488 = vmatpush1.bf16.msra.mxu0 %v485
        %489 = vmatprep.subr.bf16.mxu0 0
        %490 = vmatpush1.bf16.msra.mxu0 0
        %491 = vmatprep.subr.bf16.mxu0 0
        %492 = vmatpush1.bf16.msra.mxu0 0
        %493 = vmatprep.subr.bf16.mxu0 0
        %494 = vmatpush1.bf16.msra.mxu0 0
        %495 = vmatprep.subr.bf16.mxu0 0
        %496 = vmatpush1.bf16.msra.mxu0 0
        %497 = vmatprep.subr.bf16.mxu0 0
        %498 = vmatpush1.bf16.msra.mxu0 0
        %499 = vmatprep.subr.bf16.mxu0 0
        %500 = vmatpush1.bf16.msra.mxu0 0
        %501 = vmatprep.subr.bf16.mxu0 0
        %502 = vmatpush1.bf16.msra.mxu0 0
        %503 = vmatprep.subr.bf16.mxu0 0
        %504 = vmatpush1.bf16.msra.mxu0 0
        %505 = vmatprep.subr.bf16.mxu0 0
        %506 = vmatpush1.bf16.msra.mxu0 0
        %507 = vmatprep.subr.bf16.mxu0 0
        %508 = vmatpush1.bf16.msra.mxu0 0
        %509 = vmatprep.subr.bf16.mxu0 0
        %510 = vmatpush1.bf16.msra.mxu0 0
        %511 = vmatprep.subr.bf16.mxu0 0
        %512 = vmatpush1.bf16.msra.mxu0 0
        %513 = vmatprep.subr.bf16.mxu0 0
        %514 = vmatpush1.bf16.msra.mxu0 0
        %515 = vmatprep.subr.bf16.mxu0 0
        %516 = vmatpush1.bf16.msra.mxu0 0
        %517 = vmatprep.subr.bf16.mxu0 0
        %518 = vmatpush1.bf16.msra.mxu0 0
        %519 = vmatprep.mubr.bf16.mxu0 0
        %520 = vmatmul.mubr.bf16.gmra.mrb[0].mxu0 %v482
        %v521 = vpop.f32.mrb[0].mxu0
        %v522 = vadd.f32 0.0, %v521
        %v523 = vpop.f32.mrb[0].mxu0
        %v524 = vpop.f32.mrb[0].mxu0
        %v525 = vpop.f32.mrb[0].mxu0
        %526 = vdwg.mxu0
        %528 = vrot.lane.b32.xlu0 %v522, 8
        %v529 = vpop.permute.xlu0 %528
        %vm531 = vcmask 130112
        %532 = vst.msk [vmem:[#allocation2] sm:$0xff] %vm531, %v529
        %533 = vrot.lane.b32.xlu0 %v304, 112
        %v534 = vpop.permute.xlu0 %533
        %535 = vrot.lane.b32.xlu0 %v304, 80
        %v536 = vpop.permute.xlu0 %535
        %v538 = vsel %vm308, %v534, 0
        %v541 = vsel %vm308, %v536, 0
        %543 = vmatprep.subr.bf16.mxu0 0
        %544 = vmatpush1.bf16.xpose.msra.mxu0 %v541
        %545 = vmatprep.subr.bf16.mxu0 0
        %546 = vmatpush1.bf16.xpose.msra.mxu0 0
        %547 = vmatprep.subr.bf16.mxu0 0
        %548 = vmatpush1.bf16.xpose.msra.mxu0 0
        %549 = vmatprep.subr.bf16.mxu0 0
        %550 = vmatpush1.bf16.xpose.msra.mxu0 0
        %551 = vmatprep.subr.bf16.mxu0 0
        %552 = vmatpush1.bf16.xpose.msra.mxu0 0
        %553 = vmatprep.subr.bf16.mxu0 0
        %554 = vmatpush1.bf16.xpose.msra.mxu0 0
        %555 = vmatprep.subr.bf16.mxu0 0
        %556 = vmatpush1.bf16.xpose.msra.mxu0 0
        %557 = vmatprep.subr.bf16.mxu0 0
        %558 = vmatpush1.bf16.xpose.msra.mxu0 0
        %559 = vmatprep.subr.bf16.mxu0 0
        %560 = vmatpush1.bf16.xpose.msra.mxu0 0
        %561 = vmatprep.subr.bf16.mxu0 0
        %562 = vmatpush1.bf16.xpose.msra.mxu0 0
        %563 = vmatprep.subr.bf16.mxu0 0
        %564 = vmatpush1.bf16.xpose.msra.mxu0 0
        %565 = vmatprep.subr.bf16.mxu0 0
        %566 = vmatpush1.bf16.xpose.msra.mxu0 0
        %567 = vmatprep.subr.bf16.mxu0 0
        %568 = vmatpush1.bf16.xpose.msra.mxu0 0
        %569 = vmatprep.subr.bf16.mxu0 0
        %570 = vmatpush1.bf16.xpose.msra.mxu0 0
        %571 = vmatprep.subr.bf16.mxu0 0
        %572 = vmatpush1.bf16.xpose.msra.mxu0 0
        %573 = vmatprep.subr.bf16.mxu0 0
        %574 = vmatpush1.bf16.xpose.msra.mxu0 0
        %575 = vmatprep.mubr.bf16.mxu0 0
        %576 = vmatmul.mubr.bf16.gmra.mrb[0].mxu0 %v538
        %v577 = vpop.f32.mrb[0].mxu0
        %v578 = vadd.f32 0.0, %v577
        %v579 = vpop.f32.mrb[0].mxu0
        %v580 = vpop.f32.mrb[0].mxu0
        %v581 = vpop.f32.mrb[0].mxu0
        %582 = vdwg.mxu0
        %v583 = vsel %vm308, %v578, -inf
        %584 = vmax.xlane.f32.xlu0 %v583
        %v585 = vpop.xlane.xlu0 %584
        %v586 = vsub.f32 %v578, %v585
        %v587 = vmul.f32 %v586, 1.442695
        %v588 = vpow.pop %v587
        %v589 = vsel %vm308, %v588, 0.0
        %590 = vadd.xlane.f32.xlu0 %v589
        %v591 = vpop.xlane.xlu0 %590
        %v592 = vrcp.pop %v591
        %v593 = vmul.f32 %v588, %v592
        %v594 = vpack.c.bf16 %v593, %v593
        %595 = vrot.lane.b32.xlu0 %v304, 48
        %v596 = vpop.permute.xlu0 %595
        %v598 = vsel %vm308, %v594, 0
        %v601 = vsel %vm372, %v596, 0
        %603 = vmatprep.subr.bf16.mxu0 0
        %604 = vmatpush1.bf16.msra.mxu0 %v601
        %605 = vmatprep.subr.bf16.mxu0 0
        %606 = vmatpush1.bf16.msra.mxu0 0
        %607 = vmatprep.subr.bf16.mxu0 0
        %608 = vmatpush1.bf16.msra.mxu0 0
        %609 = vmatprep.subr.bf16.mxu0 0
        %610 = vmatpush1.bf16.msra.mxu0 0
        %611 = vmatprep.subr.bf16.mxu0 0
        %612 = vmatpush1.bf16.msra.mxu0 0
        %613 = vmatprep.subr.bf16.mxu0 0
        %614 = vmatpush1.bf16.msra.mxu0 0
        %615 = vmatprep.subr.bf16.mxu0 0
        %616 = vmatpush1.bf16.msra.mxu0 0
        %617 = vmatprep.subr.bf16.mxu0 0
        %618 = vmatpush1.bf16.msra.mxu0 0
        %619 = vmatprep.subr.bf16.mxu0 0
        %620 = vmatpush1.bf16.msra.mxu0 0
        %621 = vmatprep.subr.bf16.mxu0 0
        %622 = vmatpush1.bf16.msra.mxu0 0
        %623 = vmatprep.subr.bf16.mxu0 0
        %624 = vmatpush1.bf16.msra.mxu0 0
        %625 = vmatprep.subr.bf16.mxu0 0
        %626 = vmatpush1.bf16.msra.mxu0 0
        %627 = vmatprep.subr.bf16.mxu0 0
        %628 = vmatpush1.bf16.msra.mxu0 0
        %629 = vmatprep.subr.bf16.mxu0 0
        %630 = vmatpush1.bf16.msra.mxu0 0
        %631 = vmatprep.subr.bf16.mxu0 0
        %632 = vmatpush1.bf16.msra.mxu0 0
        %633 = vmatprep.subr.bf16.mxu0 0
        %634 = vmatpush1.bf16.msra.mxu0 0
        %635 = vmatprep.mubr.bf16.mxu0 0
        %636 = vmatmul.mubr.bf16.gmra.mrb[0].mxu0 %v598
        %v637 = vpop.f32.mrb[0].mxu0
        %v638 = vadd.f32 0.0, %v637
        %v639 = vpop.f32.mrb[0].mxu0
        %v640 = vpop.f32.mrb[0].mxu0
        %v641 = vpop.f32.mrb[0].mxu0
        %642 = vdwg.mxu0
        %644 = vrot.lane.b32.xlu0 %v638, 16
        %v645 = vpop.permute.xlu0 %644
        %vm647 = vcmask 195712
        %648 = vst.msk [vmem:[#allocation2] sm:$0xff] %vm647, %v645
        %649 = vrot.lane.b32.xlu0 %v304, 104
        %v650 = vpop.permute.xlu0 %649
        %651 = vrot.lane.b32.xlu0 %v304, 72
        %v652 = vpop.permute.xlu0 %651
        %v654 = vsel %vm308, %v650, 0
        %v657 = vsel %vm308, %v652, 0
        %659 = vmatprep.subr.bf16.mxu0 0
        %660 = vmatpush1.bf16.xpose.msra.mxu0 %v657
        %661 = vmatprep.subr.bf16.mxu0 0
        %662 = vmatpush1.bf16.xpose.msra.mxu0 0
        %663 = vmatprep.subr.bf16.mxu0 0
        %664 = vmatpush1.bf16.xpose.msra.mxu0 0
        %665 = vmatprep.subr.bf16.mxu0 0
        %666 = vmatpush1.bf16.xpose.msra.mxu0 0
        %667 = vmatprep.subr.bf16.mxu0 0
        %668 = vmatpush1.bf16.xpose.msra.mxu0 0
        %669 = vmatprep.subr.bf16.mxu0 0
        %670 = vmatpush1.bf16.xpose.msra.mxu0 0
        %671 = vmatprep.subr.bf16.mxu0 0
        %672 = vmatpush1.bf16.xpose.msra.mxu0 0
        %673 = vmatprep.subr.bf16.mxu0 0
        %674 = vmatpush1.bf16.xpose.msra.mxu0 0
        %675 = vmatprep.subr.bf16.mxu0 0
        %676 = vmatpush1.bf16.xpose.msra.mxu0 0
        %677 = vmatprep.subr.bf16.mxu0 0
        %678 = vmatpush1.bf16.xpose.msra.mxu0 0
        %679 = vmatprep.subr.bf16.mxu0 0
        %680 = vmatpush1.bf16.xpose.msra.mxu0 0
        %681 = vmatprep.subr.bf16.mxu0 0
        %682 = vmatpush1.bf16.xpose.msra.mxu0 0
        %683 = vmatprep.subr.bf16.mxu0 0
        %684 = vmatpush1.bf16.xpose.msra.mxu0 0
        %685 = vmatprep.subr.bf16.mxu0 0
        %686 = vmatpush1.bf16.xpose.msra.mxu0 0
        %687 = vmatprep.subr.bf16.mxu0 0
        %688 = vmatpush1.bf16.xpose.msra.mxu0 0
        %689 = vmatprep.subr.bf16.mxu0 0
        %690 = vmatpush1.bf16.xpose.msra.mxu0 0
        %691 = vmatprep.mubr.bf16.mxu0 0
        %692 = vmatmul.mubr.bf16.gmra.mrb[0].mxu0 %v654
        %v693 = vpop.f32.mrb[0].mxu0
        %v694 = vadd.f32 0.0, %v693
        %v695 = vpop.f32.mrb[0].mxu0
        %v696 = vpop.f32.mrb[0].mxu0
        %v697 = vpop.f32.mrb[0].mxu0
        %698 = vdwg.mxu0
        %v699 = vsel %vm308, %v694, -inf
        %700 = vmax.xlane.f32.xlu0 %v699
        %v701 = vpop.xlane.xlu0 %700
        %v702 = vsub.f32 %v694, %v701
        %v703 = vmul.f32 %v702, 1.442695
        %v704 = vpow.pop %v703
        %v705 = vsel %vm308, %v704, 0.0
        %706 = vadd.xlane.f32.xlu0 %v705
        %v707 = vpop.xlane.xlu0 %706
        %v708 = vrcp.pop %v707
        %v709 = vmul.f32 %v704, %v708
        %v710 = vpack.c.bf16 %v709, %v709
        %711 = vrot.lane.b32.xlu0 %v304, 40
        %v712 = vpop.permute.xlu0 %711
        %v714 = vsel %vm308, %v710, 0
        %v717 = vsel %vm372, %v712, 0
        %719 = vmatprep.subr.bf16.mxu0 0
        %720 = vmatpush1.bf16.msra.mxu0 %v717
        %721 = vmatprep.subr.bf16.mxu0 0
        %722 = vmatpush1.bf16.msra.mxu0 0
        %723 = vmatprep.subr.bf16.mxu0 0
        %724 = vmatpush1.bf16.msra.mxu0 0
        %725 = vmatprep.subr.bf16.mxu0 0
        %726 = vmatpush1.bf16.msra.mxu0 0
        %727 = vmatprep.subr.bf16.mxu0 0
        %728 = vmatpush1.bf16.msra.mxu0 0
        %729 = vmatprep.subr.bf16.mxu0 0
        %730 = vmatpush1.bf16.msra.mxu0 0
        %731 = vmatprep.subr.bf16.mxu0 0
        %732 = vmatpush1.bf16.msra.mxu0 0
        %733 = vmatprep.subr.bf16.mxu0 0
        %734 = vmatpush1.bf16.msra.mxu0 0
        %735 = vmatprep.subr.bf16.mxu0 0
        %736 = vmatpush1.bf16.msra.mxu0 0
        %737 = vmatprep.subr.bf16.mxu0 0
        %738 = vmatpush1.bf16.msra.mxu0 0
        %739 = vmatprep.subr.bf16.mxu0 0
        %740 = vmatpush1.bf16.msra.mxu0 0
        %741 = vmatprep.subr.bf16.mxu0 0
        %742 = vmatpush1.bf16.msra.mxu0 0
        %743 = vmatprep.subr.bf16.mxu0 0
        %744 = vmatpush1.bf16.msra.mxu0 0
        %745 = vmatprep.subr.bf16.mxu0 0
        %746 = vmatpush1.bf16.msra.mxu0 0
        %747 = vmatprep.subr.bf16.mxu0 0
        %748 = vmatpush1.bf16.msra.mxu0 0
        %749 = vmatprep.subr.bf16.mxu0 0
        %750 = vmatpush1.bf16.msra.mxu0 0
        %751 = vmatprep.mubr.bf16.mxu0 0
        %752 = vmatmul.mubr.bf16.gmra.mrb[0].mxu0 %v714
        %v753 = vpop.f32.mrb[0].mxu0
        %v754 = vadd.f32 0.0, %v753
        %v755 = vpop.f32.mrb[0].mxu0
        %v756 = vpop.f32.mrb[0].mxu0
        %v757 = vpop.f32.mrb[0].mxu0
        %758 = vdwg.mxu0
        %760 = vrot.lane.b32.xlu0 %v754, 24
        %v761 = vpop.permute.xlu0 %760
        %vm763 = vcmask 261312
        %764 = vst.msk [vmem:[#allocation2] sm:$0xff] %vm763, %v761
        %v765 = vld [vmem:[#allocation2] sm:$0xff]
        %v766 = vpack.c.bf16 %v765, %v765
        %v767 = vld [vmem:[#allocation8] sm:$0xf]
        %v768 = vld [vmem:[#allocation8 + $0x4] sm:$0xf]
        %v769 = vld [vmem:[#allocation8 + $0x8] sm:$0xf]
        %v770 = vld [vmem:[#allocation8 + $0xc] sm:$0xf]
        %v771 = vld [vmem:[%s3] sm:$0x1]
        %v773 = vlaneseq
        %v774 = vshrl.u32 %v773, 7
        %v775 = vsub.s32 0, %v774
        %v776 = vrot.slane %v771, %v775
        %v782 = vunpack.c.l.b16 %v767
        %v783 = vunpack.c.l.b16 %v768
        %v784 = vunpack.c.l.b16 %v769
        %v785 = vunpack.c.l.b16 %v770
        %v786 = vpack.c.b16 %v783, %v782
        %v787 = vpack.c.b16 %v785, %v784
        %v791 = vsel %vm260, %v766, 0
        %793 = vmatprep.subr.bf16.mxu0 0
        %794 = vmatpush1.bf16.msra.mxu0 %v786
        %795 = vmatprep.subr.bf16.mxu0 0
        %796 = vmatpush1.bf16.msra.mxu0 %v787
        %797 = vmatprep.subr.bf16.mxu0 0
        %798 = vmatpush1.bf16.msra.mxu0 0
        %799 = vmatprep.subr.bf16.mxu0 0
        %800 = vmatpush1.bf16.msra.mxu0 0
        %801 = vmatprep.subr.bf16.mxu0 0
        %802 = vmatpush1.bf16.msra.mxu0 0
        %803 = vmatprep.subr.bf16.mxu0 0
        %804 = vmatpush1.bf16.msra.mxu0 0
        %805 = vmatprep.subr.bf16.mxu0 0
        %806 = vmatpush1.bf16.msra.mxu0 0
        %807 = vmatprep.subr.bf16.mxu0 0
        %808 = vmatpush1.bf16.msra.mxu0 0
        %809 = vmatprep.subr.bf16.mxu0 0
        %810 = vmatpush1.bf16.msra.mxu0 0
        %811 = vmatprep.subr.bf16.mxu0 0
        %812 = vmatpush1.bf16.msra.mxu0 0
        %813 = vmatprep.subr.bf16.mxu0 0
        %814 = vmatpush1.bf16.msra.mxu0 0
        %815 = vmatprep.subr.bf16.mxu0 0
        %816 = vmatpush1.bf16.msra.mxu0 0
        %817 = vmatprep.subr.bf16.mxu0 0
        %818 = vmatpush1.bf16.msra.mxu0 0
        %819 = vmatprep.subr.bf16.mxu0 0
        %820 = vmatpush1.bf16.msra.mxu0 0
        %821 = vmatprep.subr.bf16.mxu0 0
        %822 = vmatpush1.bf16.msra.mxu0 0
        %823 = vmatprep.subr.bf16.mxu0 0
        %824 = vmatpush1.bf16.msra.mxu0 0
        %825 = vmatprep.mubr.bf16.mxu0 0
        %826 = vmatmul.mubr.bf16.gmra.mrb[0].mxu0 %v791
        %v827 = vpop.f32.mrb[0].mxu0
        %v828 = vadd.f32 %v776, %v827
        %v829 = vpop.f32.mrb[0].mxu0
        %v830 = vpop.f32.mrb[0].mxu0
        %v831 = vpop.f32.mrb[0].mxu0
        %832 = vdwg.mxu0
        %833 = vst [vmem:[%s241] sm:$0xff] %v828
        %s834 = sand.u32 %s119, 1
        %s835 = scalar_lea.sflag [#allocation5], %s834
        %s836 = sand.u32 %s119, 1
        %s837 = smul.addr %s836, 8
        %s838 = scalar_lea.vmem [#allocation9], %s837
        // Predicated region
        $region49: #{tpu_custom_call.1} parent=35 // pred_check
          %p839 = pneg %p129
        $region50: #{tpu_custom_call.1} parent=35 // pred_check_branch
          %841 = sbr.rel (%p839) target = $region52
        $region51: #{tpu_custom_call.1} parent=35 // pred_region
          %s843 = ssub.s32 128, 128
          %844 = vsyncadd %s835, %s843
          %s845 = smul.addr %s22, 128
          %s846 = scalar_lea.hbm %s4, %s845
          %s848 = sshll.u32 %s838, 4
          %s849 = int_to_ptr.vmem [resolvable:$true] %s848
          %851 = dma.vmem_to_hbm [thread:$0]  %s849, 128, %s846, %s835
        $region52: #{tpu_custom_call.1} parent=35 // pred_fallthru
          _
      $region36: #{tpu_custom_call.1} parent=5 // pred_fallthru
        _
      %p852 = scmp.le.s32.totalorder 2, %s17
      // Predicated region
      $region53: #{tpu_custom_call.1} parent=5 // pred_check
        %p853 = pneg %p852
      $region54: #{tpu_custom_call.1} parent=5 // pred_check_branch
        %855 = sbr.rel (%p853) target = $region56
      $region55: #{tpu_custom_call.1} parent=5 // pred_region
        %s856 = ssub.s32 %s17, 2
        // Predicated region
        $region57: #{tpu_custom_call.1} parent=55 // pred_check
          %p857 = pneg %p135
        $region58: #{tpu_custom_call.1} parent=55 // pred_check_branch
          %859 = sbr.rel (%p857) target = $region60
        $region59: #{tpu_custom_call.1} parent=55 // pred_region
          %s860 = sand.u32 %s120, 1
          %s861 = scalar_lea.sflag [#allocation5], %s860
          %s862 = sand.u32 %s120, 1
          %s863 = smul.addr %s862, 8
          %s864 = scalar_lea.vmem [#allocation9], %s863
          %865 = dma.done %s861, 128
        $region60: #{tpu_custom_call.1} parent=55 // pred_fallthru
          _
      $region56: #{tpu_custom_call.1} parent=5 // pred_fallthru
        _
    $region6: #{tpu_custom_call.1} parent=1 // loop_footer
      %s21 = sadd.s32 1, %s17
    $region7: #{tpu_custom_call.1} parent=1 // loop_footer_branch
      %16 = sbr.rel target = $region3
    $region8: #{tpu_custom_call.1} parent=1 // loop_exit
      _
    %866 = vsyncpa [#allocation4], 1
    %s867 = scalar_lea.sflag [#allocation4], 1
    %868 = vsyncpa %s867, 1
    %869 = vsyncpa [#allocation7], 1
    %870 = vsyncpa [#allocation5], 1
    %s871 = scalar_lea.sflag [#allocation5], 1
    %872 = vsyncpa %s871, 1

</llo_original>
